<compile_context>
chip_gen: v6e
topology: v6e:2x2x1
jax: 0.10.0
libtpu: 0.0.40
codegen_flags: <defaults>
</compile_context>

<pallas_src>
import functools

import jax
import jax.numpy as jnp
from jax.experimental import pallas as pl
from jax.experimental.pallas import tpu as pltpu


# ----------------------------------------------------------------------------
# Fused kernel: relu( bn2(conv2( relu(bn1(conv1(x))) )) + x )   for one image
# ----------------------------------------------------------------------------
def _basic_block_kernel(x_ref, w1_ref, b1_ref, w2_ref, b2_ref, o_ref,
                        pad1, pad2):
    """x_ref : (1, H, W*C)        lane-dense input slab (also the residual)
    w1_ref : (3, W*C, W*C)        banded conv1 weights (BN1 scale folded in)
    b1_ref : (1, W*C)             BN1 bias, tiled across W
    w2_ref : (3, W*C, W*C)        banded conv2 weights (BN2 scale folded in)
    b2_ref : (1, W*C)             BN2 bias, tiled across W
    o_ref  : (1, H, W*C)
    pad1   : (H+2, W*C) VMEM      vertically zero-padded x
    pad2   : (H+2, W*C) VMEM      vertically zero-padded h (intermediate)
    """
    _, H, WC = o_ref.shape
    f32 = jnp.float32

    x = x_ref[0]                                    # (H, W*C), stays in VMEM/vregs

    # ---- stage 1: h = relu(bn1(conv1(x))) --------------------------------
    pad1[...] = jnp.zeros_like(pad1)                # zero border rows (cheap)
    pad1[1:H + 1, :] = x
    acc = jnp.zeros((H, WC), f32)
    for dy in range(3):                             # 3 banded matmuls, K = W*C
        acc += jnp.dot(pad1[dy:dy + H, :], w1_ref[dy],
                       preferred_element_type=f32)
    h = jnp.maximum(acc + b1_ref[...], 0.0)         # (H, W*C) + (1, W*C)

    # ---- stage 2: out = relu(bn2(conv2(h)) + x) --------------------------
    pad2[...] = jnp.zeros_like(pad2)
    pad2[1:H + 1, :] = h.astype(pad2.dtype)
    acc2 = jnp.zeros((H, WC), f32)
    for dy in range(3):
        acc2 += jnp.dot(pad2[dy:dy + H, :], w2_ref[dy],
                        preferred_element_type=f32)
    out = acc2 + b2_ref[...] + x.astype(f32)        # identity shortcut (resident)
    o_ref[0] = jnp.maximum(out, 0.0).astype(o_ref.dtype)


def _basic_block_pallas(x_flat, w1, bias1, w2, bias2):
    N, H, WC = x_flat.shape
    return pl.pallas_call(
        _basic_block_kernel,
        out_shape=jax.ShapeDtypeStruct((N, H, WC), x_flat.dtype),
        grid=(N,),
        in_specs=[
            pl.BlockSpec((1, H, WC), lambda n: (n, 0, 0)),
            pl.BlockSpec((3, WC, WC), lambda n: (0, 0, 0)),
            pl.BlockSpec((1, WC), lambda n: (0, 0)),
            pl.BlockSpec((3, WC, WC), lambda n: (0, 0, 0)),
            pl.BlockSpec((1, WC), lambda n: (0, 0)),
        ],
        out_specs=pl.BlockSpec((1, H, WC), lambda n: (n, 0, 0)),
        scratch_shapes=[
            pltpu.VMEM((H + 2, WC), jnp.float32),
            pltpu.VMEM((H + 2, WC), jnp.float32),
        ],
        compiler_params=pltpu.CompilerParams(
            dimension_semantics=("parallel",)),
    )(x_flat, w1, bias1, w2, bias2)


# ----------------------------------------------------------------------------
# Wrapper-side parameter preparation (runs once per call under jit; in a real
# model these would be precomputed once).
# ----------------------------------------------------------------------------
def _fold_bn(gamma, beta, mean, var, eps=1e-5):
    scale = gamma * jax.lax.rsqrt(var + eps)
    bias = beta - mean * scale
    return scale, bias


def _banded_weights(w_oihw, bn_scale, W):
    """PyTorch (Cout, Cin, 3, 3) conv weight -> (3, W*Cin, W*Cout).

    Band dy maps a full unpadded input row (W*Cin lanes) to a full output row
    (W*Cout lanes): the 3 horizontal taps, the zero horizontal padding and the
    folded BN scale are all encoded in the banded matrix, so the kernel does one
    lane-aligned matmul per kernel row.
    """
    c_out, c_in, _, _ = w_oihw.shape
    # w[dy, dx, ci, co] with BN scale folded into the output channels
    w = jnp.transpose(w_oihw, (2, 3, 1, 0)) * bn_scale[None, None, None, :]
    bands = []
    for dy in range(3):
        band = jnp.zeros((W * c_in, W * c_out), w.dtype)
        for dx in range(3):
            # selector[x+dx-1, x] = 1 (only where the input pixel exists)
            sel = jnp.eye(W, k=1 - dx, dtype=w.dtype)
            band = band + jnp.kron(sel, w[dy, dx])
        bands.append(band)
    return jnp.stack(bands)                         # (3, W*Cin, W*Cout)


@jax.jit
def basic_block_forward(x_nchw, params):
    N, C, H, W = x_nchw.shape
    c_out, c_in = params["conv1_w"].shape[:2]
    if c_in != c_out:
        raise NotImplementedError(
            "projection shortcut (in_planes != planes / stride != 1) not implemented")

    # NCHW (PyTorch) -> lane-dense (N, H, W*C).
    # TODO(synk): in a full network keep activations in this layout across layers
    # to avoid the per-block transpose passes.
    x = jnp.transpose(x_nchw, (0, 2, 3, 1)).reshape(N, H, W * C)

    s1, b1 = _fold_bn(params["bn1_g"], params["bn1_b"],
                      params["bn1_m"], params["bn1_v"])
    s2, b2 = _fold_bn(params["bn2_g"], params["bn2_b"],
                      params["bn2_m"], params["bn2_v"])
    w1 = _banded_weights(params["conv1_w"], s1, W)
    w2 = _banded_weights(params["conv2_w"], s2, W)
    bias1 = jnp.tile(b1, W)[None, :]                # lane x*C + c  ->  b1[c]
    bias2 = jnp.tile(b2, W)[None, :]

    out = _basic_block_pallas(x, w1, bias1, w2, bias2)

    # (N, H, W*C) -> NCHW
    return jnp.transpose(out.reshape(N, H, W, C), (0, 3, 1, 2))


# ----------------------------------------------------------------------------
# Pure-JAX reference (for correctness check)
# ----------------------------------------------------------------------------
def _reference(x_nchw, params, eps=1e-5):
    def conv(x, w):
        return jax.lax.conv_general_dilated(
            x, w, window_strides=(1, 1), padding=((1, 1), (1, 1)),
            dimension_numbers=("NCHW", "OIHW", "NCHW"))

    def bn(x, g, b, m, v):
        return (x - m[None, :, None, None]) / jnp.sqrt(v[None, :, None, None] + eps) \
            * g[None, :, None, None] + b[None, :, None, None]

    out = jax.nn.relu(bn(conv(x_nchw, params["conv1_w"]),
                         params["bn1_g"], params["bn1_b"],
                         params["bn1_m"], params["bn1_v"]))
    out = bn(conv(out, params["conv2_w"]),
             params["bn2_g"], params["bn2_b"],
             params["bn2_m"], params["bn2_v"])
    out = out + x_nchw                              # identity shortcut
    return jax.nn.relu(out)


# ----------------------------------------------------------------------------
if __name__ == "__main__":
    key = jax.random.PRNGKey(0)
    N, C, H, W = 2, 8, 16, 16          # in_planes == planes == 8, stride == 1
    ks = jax.random.split(key, 10)

    params = {
        "conv1_w": jax.random.normal(ks[0], (C, C, 3, 3), jnp.float32) * 0.1,
        "conv2_w": jax.random.normal(ks[1], (C, C, 3, 3), jnp.float32) * 0.1,
        "bn1_g": 1.0 + 0.1 * jax.random.normal(ks[2], (C,), jnp.float32),
        "bn1_b": 0.1 * jax.random.normal(ks[3], (C,), jnp.float32),
        "bn1_m": 0.1 * jax.random.normal(ks[4], (C,), jnp.float32),
        "bn1_v": 1.0 + 0.1 * jnp.abs(jax.random.normal(ks[5], (C,), jnp.float32)),
        "bn2_g": 1.0 + 0.1 * jax.random.normal(ks[6], (C,), jnp.float32),
        "bn2_b": 0.1 * jax.random.normal(ks[7], (C,), jnp.float32),
        "bn2_m": 0.1 * jax.random.normal(ks[8], (C,), jnp.float32),
        "bn2_v": 1.0 + 0.1 * jnp.abs(jax.random.normal(ks[9], (C,), jnp.float32)),
    }

    x = jax.random.normal(key, (N, C, H, W), jnp.float32)

    out = jax.block_until_ready(basic_block_forward(x, params))
    ref = jax.block_until_ready(_reference(x, params))

    assert out.shape == (N, C, H, W)
    max_err = jnp.max(jnp.abs(out - ref))
    assert jnp.allclose(out, ref, atol=1e-3, rtol=1e-3), f"max err {max_err}"

    print("KERNEL_OK")
</pallas_src>

<mosaic_0001>
module attributes {stable_mosaic.version = 11 : i64} {
  func.func @_basic_block_kernel(%arg0: i32, %arg1: memref<1x16x128xf32, #tpu.memory_space<vmem>>, %arg2: memref<3x128x128xf32, #tpu.memory_space<vmem>>, %arg3: memref<1x128xf32, #tpu.memory_space<vmem>>, %arg4: memref<3x128x128xf32, #tpu.memory_space<vmem>>, %arg5: memref<1x128xf32, #tpu.memory_space<vmem>>, %arg6: memref<1x16x128xf32, #tpu.memory_space<vmem>>, %arg7: memref<18x128xf32, #tpu.memory_space<vmem>>, %arg8: memref<18x128xf32, #tpu.memory_space<vmem>>) attributes {dimension_semantics = [#tpu.dimension_semantics<parallel>], iteration_bounds = array<i64: 2>, scalar_prefetch = 0 : i64, scratch_operands = 2 : i64, tpu.core_type = #tpu.core_type<tc>, window_params = [{transform_indices = @transform_0, window_bounds = array<i64: 1, 16, 128>}, {pipeline_mode = #tpu.pipeline_mode<synchronous>, transform_indices = @transform_1, window_bounds = array<i64: 3, 128, 128>}, {pipeline_mode = #tpu.pipeline_mode<synchronous>, transform_indices = @transform_2, window_bounds = array<i64: 1, 128>}, {pipeline_mode = #tpu.pipeline_mode<synchronous>, transform_indices = @transform_3, window_bounds = array<i64: 3, 128, 128>}, {pipeline_mode = #tpu.pipeline_mode<synchronous>, transform_indices = @transform_4, window_bounds = array<i64: 1, 128>}, {transform_indices = @transform_5, window_bounds = array<i64: 1, 16, 128>}]} {
    %c0 = arith.constant 0 : index
    %c0_0 = arith.constant 0 : index
    %c0_1 = arith.constant 0 : index
    %0 = vector.load %arg1[%c0, %c0_0, %c0_1] : memref<1x16x128xf32, #tpu.memory_space<vmem>>, vector<1x16x128xf32>
    %1 = vector.shape_cast %0 : vector<1x16x128xf32> to vector<16x128xf32>
    %cst = arith.constant 0.000000e+00 : f32
    %2 = vector.broadcast %cst : f32 to vector<18x128xf32>
    %c0_2 = arith.constant 0 : index
    %c0_3 = arith.constant 0 : index
    %3 = vector.load %arg7[%c0_2, %c0_3] : memref<18x128xf32, #tpu.memory_space<vmem>>, vector<18x128xf32>
    tpu.vector_store %arg7[%c0_2, %c0_3], %2 {strides = array<i32>} : memref<18x128xf32, #tpu.memory_space<vmem>>, vector<18x128xf32>,
    %c1 = arith.constant 1 : index
    %c0_4 = arith.constant 0 : index
    %4 = vector.load %arg7[%c1, %c0_4] : memref<18x128xf32, #tpu.memory_space<vmem>>, vector<16x128xf32>
    tpu.vector_store %arg7[%c1, %c0_4], %1 {strides = array<i32>} : memref<18x128xf32, #tpu.memory_space<vmem>>, vector<16x128xf32>,
    %cst_5 = arith.constant 0.000000e+00 : f32
    %5 = vector.broadcast %cst_5 : f32 to vector<16x128xf32>
    %c0_6 = arith.constant 0 : index
    %c0_7 = arith.constant 0 : index
    %6 = vector.load %arg7[%c0_6, %c0_7] : memref<18x128xf32, #tpu.memory_space<vmem>>, vector<16x128xf32>
    %c0_8 = arith.constant 0 : index
    %c0_9 = arith.constant 0 : index
    %c0_10 = arith.constant 0 : index
    %7 = vector.load %arg2[%c0_8, %c0_9, %c0_10] : memref<3x128x128xf32, #tpu.memory_space<vmem>>, vector<1x128x128xf32>
    %8 = vector.shape_cast %7 : vector<1x128x128xf32> to vector<128x128xf32>
    %cst_11 = arith.constant dense<0.000000e+00> : vector<16x128xf32>
    %9 = tpu.matmul %6, %8, %cst_11 {dimension_numbers = #tpu.dot_dimension_numbers<[1], [0], [0], [1], [0, 0, 1, 1], [], []>} : vector<16x128xf32>, vector<128x128xf32>, vector<16x128xf32> -> vector<16x128xf32>
    %10 = arith.addf %5, %9 : vector<16x128xf32>
    %c1_12 = arith.constant 1 : index
    %c0_13 = arith.constant 0 : index
    %11 = vector.load %arg7[%c1_12, %c0_13] : memref<18x128xf32, #tpu.memory_space<vmem>>, vector<16x128xf32>
    %c1_14 = arith.constant 1 : index
    %c0_15 = arith.constant 0 : index
    %c0_16 = arith.constant 0 : index
    %12 = vector.load %arg2[%c1_14, %c0_15, %c0_16] : memref<3x128x128xf32, #tpu.memory_space<vmem>>, vector<1x128x128xf32>
    %13 = vector.shape_cast %12 : vector<1x128x128xf32> to vector<128x128xf32>
    %cst_17 = arith.constant dense<0.000000e+00> : vector<16x128xf32>
    %14 = tpu.matmul %11, %13, %cst_17 {dimension_numbers = #tpu.dot_dimension_numbers<[1], [0], [0], [1], [0, 0, 1, 1], [], []>} : vector<16x128xf32>, vector<128x128xf32>, vector<16x128xf32> -> vector<16x128xf32>
    %15 = arith.addf %10, %14 : vector<16x128xf32>
    %c2 = arith.constant 2 : index
    %c0_18 = arith.constant 0 : index
    %16 = vector.load %arg7[%c2, %c0_18] : memref<18x128xf32, #tpu.memory_space<vmem>>, vector<16x128xf32>
    %c2_19 = arith.constant 2 : index
    %c0_20 = arith.constant 0 : index
    %c0_21 = arith.constant 0 : index
    %17 = vector.load %arg2[%c2_19, %c0_20, %c0_21] : memref<3x128x128xf32, #tpu.memory_space<vmem>>, vector<1x128x128xf32>
    %18 = vector.shape_cast %17 : vector<1x128x128xf32> to vector<128x128xf32>
    %cst_22 = arith.constant dense<0.000000e+00> : vector<16x128xf32>
    %19 = tpu.matmul %16, %18, %cst_22 {dimension_numbers = #tpu.dot_dimension_numbers<[1], [0], [0], [1], [0, 0, 1, 1], [], []>} : vector<16x128xf32>, vector<128x128xf32>, vector<16x128xf32> -> vector<16x128xf32>
    %20 = arith.addf %15, %19 : vector<16x128xf32>
    %c0_23 = arith.constant 0 : index
    %c0_24 = arith.constant 0 : index
    %21 = vector.load %arg3[%c0_23, %c0_24] : memref<1x128xf32, #tpu.memory_space<vmem>>, vector<1x128xf32>
    %22 = vector.broadcast %21 : vector<1x128xf32> to vector<16x128xf32>
    %23 = arith.addf %20, %22 : vector<16x128xf32>
    %cst_25 = arith.constant 0.000000e+00 : f32
    %24 = vector.broadcast %cst_25 : f32 to vector<16x128xf32>
    %25 = arith.maximumf %23, %24 : vector<16x128xf32>
    %cst_26 = arith.constant 0.000000e+00 : f32
    %26 = vector.broadcast %cst_26 : f32 to vector<18x128xf32>
    %c0_27 = arith.constant 0 : index
    %c0_28 = arith.constant 0 : index
    %27 = vector.load %arg8[%c0_27, %c0_28] : memref<18x128xf32, #tpu.memory_space<vmem>>, vector<18x128xf32>
    tpu.vector_store %arg8[%c0_27, %c0_28], %26 {strides = array<i32>} : memref<18x128xf32, #tpu.memory_space<vmem>>, vector<18x128xf32>,
    %c1_29 = arith.constant 1 : index
    %c0_30 = arith.constant 0 : index
    %28 = vector.load %arg8[%c1_29, %c0_30] : memref<18x128xf32, #tpu.memory_space<vmem>>, vector<16x128xf32>
    tpu.vector_store %arg8[%c1_29, %c0_30], %25 {strides = array<i32>} : memref<18x128xf32, #tpu.memory_space<vmem>>, vector<16x128xf32>,
    %cst_31 = arith.constant 0.000000e+00 : f32
    %29 = vector.broadcast %cst_31 : f32 to vector<16x128xf32>
    %c0_32 = arith.constant 0 : index
    %c0_33 = arith.constant 0 : index
    %30 = vector.load %arg8[%c0_32, %c0_33] : memref<18x128xf32, #tpu.memory_space<vmem>>, vector<16x128xf32>
    %c0_34 = arith.constant 0 : index
    %c0_35 = arith.constant 0 : index
    %c0_36 = arith.constant 0 : index
    %31 = vector.load %arg4[%c0_34, %c0_35, %c0_36] : memref<3x128x128xf32, #tpu.memory_space<vmem>>, vector<1x128x128xf32>
    %32 = vector.shape_cast %31 : vector<1x128x128xf32> to vector<128x128xf32>
    %cst_37 = arith.constant dense<0.000000e+00> : vector<16x128xf32>
    %33 = tpu.matmul %30, %32, %cst_37 {dimension_numbers = #tpu.dot_dimension_numbers<[1], [0], [0], [1], [0, 0, 1, 1], [], []>} : vector<16x128xf32>, vector<128x128xf32>, vector<16x128xf32> -> vector<16x128xf32>
    %34 = arith.addf %29, %33 : vector<16x128xf32>
    %c1_38 = arith.constant 1 : index
    %c0_39 = arith.constant 0 : index
    %35 = vector.load %arg8[%c1_38, %c0_39] : memref<18x128xf32, #tpu.memory_space<vmem>>, vector<16x128xf32>
    %c1_40 = arith.constant 1 : index
    %c0_41 = arith.constant 0 : index
    %c0_42 = arith.constant 0 : index
    %36 = vector.load %arg4[%c1_40, %c0_41, %c0_42] : memref<3x128x128xf32, #tpu.memory_space<vmem>>, vector<1x128x128xf32>
    %37 = vector.shape_cast %36 : vector<1x128x128xf32> to vector<128x128xf32>
    %cst_43 = arith.constant dense<0.000000e+00> : vector<16x128xf32>
    %38 = tpu.matmul %35, %37, %cst_43 {dimension_numbers = #tpu.dot_dimension_numbers<[1], [0], [0], [1], [0, 0, 1, 1], [], []>} : vector<16x128xf32>, vector<128x128xf32>, vector<16x128xf32> -> vector<16x128xf32>
    %39 = arith.addf %34, %38 : vector<16x128xf32>
    %c2_44 = arith.constant 2 : index
    %c0_45 = arith.constant 0 : index
    %40 = vector.load %arg8[%c2_44, %c0_45] : memref<18x128xf32, #tpu.memory_space<vmem>>, vector<16x128xf32>
    %c2_46 = arith.constant 2 : index
    %c0_47 = arith.constant 0 : index
    %c0_48 = arith.constant 0 : index
    %41 = vector.load %arg4[%c2_46, %c0_47, %c0_48] : memref<3x128x128xf32, #tpu.memory_space<vmem>>, vector<1x128x128xf32>
    %42 = vector.shape_cast %41 : vector<1x128x128xf32> to vector<128x128xf32>
    %cst_49 = arith.constant dense<0.000000e+00> : vector<16x128xf32>
    %43 = tpu.matmul %40, %42, %cst_49 {dimension_numbers = #tpu.dot_dimension_numbers<[1], [0], [0], [1], [0, 0, 1, 1], [], []>} : vector<16x128xf32>, vector<128x128xf32>, vector<16x128xf32> -> vector<16x128xf32>
    %44 = arith.addf %39, %43 : vector<16x128xf32>
    %c0_50 = arith.constant 0 : index
    %c0_51 = arith.constant 0 : index
    %45 = vector.load %arg5[%c0_50, %c0_51] : memref<1x128xf32, #tpu.memory_space<vmem>>, vector<1x128xf32>
    %46 = vector.broadcast %45 : vector<1x128xf32> to vector<16x128xf32>
    %47 = arith.addf %44, %46 : vector<16x128xf32>
    %48 = arith.addf %47, %1 : vector<16x128xf32>
    %cst_52 = arith.constant 0.000000e+00 : f32
    %49 = vector.broadcast %cst_52 : f32 to vector<16x128xf32>
    %50 = arith.maximumf %48, %49 : vector<16x128xf32>
    %c0_53 = arith.constant 0 : index
    %c0_54 = arith.constant 0 : index
    %c0_55 = arith.constant 0 : index
    %51 = vector.load %arg6[%c0_53, %c0_54, %c0_55] : memref<1x16x128xf32, #tpu.memory_space<vmem>>, vector<1x16x128xf32>
    %52 = vector.shape_cast %51 : vector<1x16x128xf32> to vector<16x128xf32>
    %53 = vector.shape_cast %50 : vector<16x128xf32> to vector<1x16x128xf32>
    tpu.vector_store %arg6[%c0_53, %c0_54, %c0_55], %53 {strides = array<i32>} : memref<1x16x128xf32, #tpu.memory_space<vmem>>, vector<1x16x128xf32>,
    return
  }
  func.func @transform_0(%arg0: i32) -> (i32, i32, i32) {
    %c0_i32 = arith.constant 0 : i32
    %c0_i32_0 = arith.constant 0 : i32
    %c0_i32_1 = arith.constant 0 : i32
    return %arg0, %c0_i32, %c0_i32_0 : i32, i32, i32
  }
  func.func @transform_1(%arg0: i32) -> (i32, i32, i32) {
    %c0_i32 = arith.constant 0 : i32
    %c0_i32_0 = arith.constant 0 : i32
    %c0_i32_1 = arith.constant 0 : i32
    %c0_i32_2 = arith.constant 0 : i32
    return %c0_i32, %c0_i32_0, %c0_i32_1 : i32, i32, i32
  }
  func.func @transform_2(%arg0: i32) -> (i32, i32) {
    %c0_i32 = arith.constant 0 : i32
    %c0_i32_0 = arith.constant 0 : i32
    %c0_i32_1 = arith.constant 0 : i32
    return %c0_i32, %c0_i32_0 : i32, i32
  }
  func.func @transform_3(%arg0: i32) -> (i32, i32, i32) {
    %c0_i32 = arith.constant 0 : i32
    %c0_i32_0 = arith.constant 0 : i32
    %c0_i32_1 = arith.constant 0 : i32
    %c0_i32_2 = arith.constant 0 : i32
    return %c0_i32, %c0_i32_0, %c0_i32_1 : i32, i32, i32
  }
  func.func @transform_4(%arg0: i32) -> (i32, i32) {
    %c0_i32 = arith.constant 0 : i32
    %c0_i32_0 = arith.constant 0 : i32
    %c0_i32_1 = arith.constant 0 : i32
    return %c0_i32, %c0_i32_0 : i32, i32
  }
  func.func @transform_5(%arg0: i32) -> (i32, i32, i32) {
    %c0_i32 = arith.constant 0 : i32
    %c0_i32_0 = arith.constant 0 : i32
    %c0_i32_1 = arith.constant 0 : i32
    return %arg0, %c0_i32, %c0_i32_0 : i32, i32, i32
  }
}

</mosaic_0001>

<llo_original>
// kernel: tile.13
$region0: #{tile.13}
  #allocation0 [shape = 's32[1]{0}', space=sflag, size = 0x4, scoped, tag = 'scoped memory for tile.13']
  %s0 = inlined_call_operand.vmem [shape: f32[8], index: 0, kind: input, shape index: {}]
  %s1 = inlined_call_operand.vmem [shape: f32[16,8], index: 1, kind: output, shape index: {}]
  // Predicated region
  $region2: #{tile.13} parent=0 // pred_check
    _
  $region3: #{tile.13} parent=0 // pred_check_branch
    %3 = sbr.rel (0) target = $region5
  $region4: #{tile.13} parent=0 // pred_region
    _
  $region5: #{tile.13} parent=0 // pred_fallthru
    _
  %v4 = vld [vmem:[%s0] ss:$0 sm:$0xff]
  %5 = vst [vmem:[%s1] sm:$0xff] %v4
  %s6 = scalar_lea.vmem %s1, 8
  %7 = vst [vmem:[%s6] sm:$0xff] %v4

// kernel: tile.14
$region0: #{tile.14}
  %s0 = inlined_call_operand.vmem [shape: f32[16,8], index: 0, kind: input, shape index: {}]
  %s1 = inlined_call_operand.vmem [shape: f32[1,128], index: 1, kind: output, shape index: {}]
  $region1: #{tile.14} parent=0
    #allocation0 [shape = 'u8[4096]{0}', space=vmem, size = 0x1000, scoped, tag = 'scoped mem for output reshape']
    %v2 = vld [vmem:[%s0] sm:$0x1]
    %vm3 = vcmask 64512
    %4 = vst.msk [vmem:[#allocation0] sm:$0x1] %vm3, %v2
    %s5 = scalar_lea.vmem %s0, 15
    %v6 = vld [vmem:[%s5] sm:$0x1]
    %7 = vrot.lane.b32.xlu0 %v6, 120
    %v8 = vpop.permute.xlu0 %7
    %vm9 = vcmask 1048512
    %10 = vst.msk [vmem:[#allocation0] sm:$0x1] %vm9, %v8
    %s11 = scalar_lea.vmem %s0, 14
    %v12 = vld [vmem:[%s11] sm:$0x1]
    %13 = vrot.lane.b32.xlu0 %v12, 112
    %v14 = vpop.permute.xlu0 %13
    %vm15 = vcmask 982912
    %16 = vst.msk [vmem:[#allocation0] sm:$0x1] %vm15, %v14
    %s17 = scalar_lea.vmem %s0, 13
    %v18 = vld [vmem:[%s17] sm:$0x1]
    %19 = vrot.lane.b32.xlu0 %v18, 104
    %v20 = vpop.permute.xlu0 %19
    %vm21 = vcmask 917312
    %22 = vst.msk [vmem:[#allocation0] sm:$0x1] %vm21, %v20
    %s23 = scalar_lea.vmem %s0, 12
    %v24 = vld [vmem:[%s23] sm:$0x1]
    %25 = vrot.lane.b32.xlu0 %v24, 96
    %v26 = vpop.permute.xlu0 %25
    %vm27 = vcmask 851712
    %28 = vst.msk [vmem:[#allocation0] sm:$0x1] %vm27, %v26
    %s29 = scalar_lea.vmem %s0, 11
    %v30 = vld [vmem:[%s29] sm:$0x1]
    %31 = vrot.lane.b32.xlu0 %v30, 88
    %v32 = vpop.permute.xlu0 %31
    %vm33 = vcmask 786112
    %34 = vst.msk [vmem:[#allocation0] sm:$0x1] %vm33, %v32
    %s35 = scalar_lea.vmem %s0, 10
    %v36 = vld [vmem:[%s35] sm:$0x1]
    %37 = vrot.lane.b32.xlu0 %v36, 80
    %v38 = vpop.permute.xlu0 %37
    %vm39 = vcmask 720512
    %40 = vst.msk [vmem:[#allocation0] sm:$0x1] %vm39, %v38
    %s41 = scalar_lea.vmem %s0, 9
    %v42 = vld [vmem:[%s41] sm:$0x1]
    %43 = vrot.lane.b32.xlu0 %v42, 72
    %v44 = vpop.permute.xlu0 %43
    %vm45 = vcmask 654912
    %46 = vst.msk [vmem:[#allocation0] sm:$0x1] %vm45, %v44
    %s47 = scalar_lea.vmem %s0, 8
    %v48 = vld [vmem:[%s47] sm:$0x1]
    %49 = vrot.lane.b32.xlu0 %v48, 64
    %v50 = vpop.permute.xlu0 %49
    %vm51 = vcmask 589312
    %52 = vst.msk [vmem:[#allocation0] sm:$0x1] %vm51, %v50
    %s53 = scalar_lea.vmem %s0, 7
    %v54 = vld [vmem:[%s53] sm:$0x1]
    %55 = vrot.lane.b32.xlu0 %v54, 56
    %v56 = vpop.permute.xlu0 %55
    %vm57 = vcmask 523712
    %58 = vst.msk [vmem:[#allocation0] sm:$0x1] %vm57, %v56
    %s59 = scalar_lea.vmem %s0, 6
    %v60 = vld [vmem:[%s59] sm:$0x1]
    %61 = vrot.lane.b32.xlu0 %v60, 48
    %v62 = vpop.permute.xlu0 %61
    %vm63 = vcmask 458112
    %64 = vst.msk [vmem:[#allocation0] sm:$0x1] %vm63, %v62
    %s65 = scalar_lea.vmem %s0, 5
    %v66 = vld [vmem:[%s65] sm:$0x1]
    %67 = vrot.lane.b32.xlu0 %v66, 40
    %v68 = vpop.permute.xlu0 %67
    %vm69 = vcmask 392512
    %70 = vst.msk [vmem:[#allocation0] sm:$0x1] %vm69, %v68
    %s71 = scalar_lea.vmem %s0, 4
    %v72 = vld [vmem:[%s71] sm:$0x1]
    %73 = vrot.lane.b32.xlu0 %v72, 32
    %v74 = vpop.permute.xlu0 %73
    %vm75 = vcmask 326912
    %76 = vst.msk [vmem:[#allocation0] sm:$0x1] %vm75, %v74
    %s77 = scalar_lea.vmem %s0, 3
    %v78 = vld [vmem:[%s77] sm:$0x1]
    %79 = vrot.lane.b32.xlu0 %v78, 24
    %v80 = vpop.permute.xlu0 %79
    %vm81 = vcmask 261312
    %82 = vst.msk [vmem:[#allocation0] sm:$0x1] %vm81, %v80
    %s83 = scalar_lea.vmem %s0, 2
    %v84 = vld [vmem:[%s83] sm:$0x1]
    %85 = vrot.lane.b32.xlu0 %v84, 16
    %v86 = vpop.permute.xlu0 %85
    %vm87 = vcmask 195712
    %88 = vst.msk [vmem:[#allocation0] sm:$0x1] %vm87, %v86
    %s89 = scalar_lea.vmem %s0, 1
    %v90 = vld [vmem:[%s89] sm:$0x1]
    %91 = vrot.lane.b32.xlu0 %v90, 8
    %v92 = vpop.permute.xlu0 %91
    %vm93 = vcmask 130112
    %94 = vst.msk [vmem:[#allocation0] sm:$0x1] %vm93, %v92
    %s96 = sshll.u32 1, 1
    %s97 = ssub.s32 %s96, 1
    %v99 = vld [vmem:[#allocation0] sm:%s97]
    %s100 = sshll.u32 1, 1
    %s101 = ssub.s32 %s100, 1
    %102 = vst [vmem:[%s1] sm:%s101] %v99

// kernel: basic_block_forward.1
$region0: #{basic_block_forward.1}
  #allocation0 [shape = 'u32[]', space=smem, size = 0x4, offset = 0x4, fixed_abs, tag = 'smem constant byte address 0x4 - core index']
  #allocation1 [shape = 'u32[144,128]{1,0:T(1,128)}', space=vmem, size = 0x12000, scoped, tag = 'internal scratch']
  #allocation2 [shape = 'f32[18,128]{1,0:T(8,128)}', space=vmem, size = 0x3000, scoped, tag = 'scratch operand']
  #allocation3 [shape = 'f32[18,128]{1,0:T(8,128)}', space=vmem, size = 0x3000, scoped, tag = 'scratch operand']
  %s0 = inlined_call_operand.vmem [shape: f32[2,16,128], index: 0, kind: input, shape index: {}]
  %s1 = inlined_call_operand.vmem [shape: f32[3,128,128], index: 1, kind: input, shape index: {}]
  %s2 = inlined_call_operand.vmem [shape: f32[1,128], index: 2, kind: input, shape index: {}]
  %s3 = inlined_call_operand.vmem [shape: f32[3,128,128], index: 3, kind: input, shape index: {}]
  %s4 = inlined_call_operand.vmem [shape: f32[1,128], index: 4, kind: input, shape index: {}]
  %s5 = inlined_call_operand.vmem [shape: f32[2,16,128], index: 5, kind: output, shape index: {}]
  %s6 = sld [smem:[#allocation0]]
  $region53: #{basic_block_forward.1} parent=0
    _
  %s8 = ssub.s32 1, %s6
  %s9 = scalar_select 0, %s8, %s6
  loop: start=0, step=1, limit=4
  $region2: #{basic_block_forward.1} parent=0 // loop_pre_header
    _
  $region3: #{basic_block_forward.1} parent=0 // loop_header
    %s11 = sphi 0, %s15
    %p12 = scmp.ge.s32.totalorder %s11, 4
    %s21 = sphi 0, %s23
    %s24 = sphi 0, %s21
    %s25 = sphi 0, %s24
    %s41 = sphi 0, %s25
    %s45 = sphi 0, %s45
    %s47 = sphi 0, %s45
    %s48 = sphi 0, %s47
    %s62 = sphi 0, %s48
    %s66 = sphi 0, %s66
    %s68 = sphi 0, %s66
    %s69 = sphi 0, %s68
    %s83 = sphi 0, %s69
    %s87 = sphi 0, %s87
    %s89 = sphi 0, %s87
    %s90 = sphi 0, %s89
    %s104 = sphi 0, %s90
    %s108 = sphi 0, %s108
    %s110 = sphi 0, %s108
    %s111 = sphi 0, %s110
    %s125 = sphi 0, %s111
    %s131 = sphi 0, %s133
    %s134 = sphi 0, %s131
    %s135 = sphi 0, %s134
    %s151 = sphi 0, %s135
  $region4: #{basic_block_forward.1} parent=0 // loop_header_branch
    %14 = sbr.rel (%p12) target = $region8
  $region5: #{basic_block_forward.1} parent=0 // loop_body
    %s16 = ssub.s32 %s11, 1
    %s17 = ssub.s32 %s11, 2
    %s18 = sadd.s32 %s11, 1
    %s19 = ssub.s32 %s11, %s18
    %p20 = scmp.eq.s32.totalorder %s19, 0
    %s22 = sadd.s32 %s21, 1
    %s23 = scalar_select %p20, %s21, %s22
    %p26 = pneg %p20
    %p27 = scmp.eq.s32.totalorder %s11, 1
    %p28 = por %p26, %p27
    %p29 = scmp.ne.s32.totalorder %s21, %s24
    %p30 = scmp.eq.s32.totalorder %s11, 0
    %p31 = por %p29, %p30
    %p32 = scmp.ne.s32.totalorder %s21, %s24
    %p33 = scmp.eq.s32.totalorder %s16, 1
    %p34 = por %p32, %p33
    %p35 = scmp.ne.s32.totalorder %s24, %s25
    %p36 = scmp.eq.s32.totalorder %s16, 0
    %p37 = por %p35, %p36
    %p38 = scmp.ne.s32.totalorder %s24, %s25
    %p39 = scmp.eq.s32.totalorder %s17, 1
    %p40 = por %p38, %p39
    %p42 = scmp.ne.s32.totalorder %s25, %s41
    %p43 = scmp.eq.s32.totalorder %s17, 0
    %p44 = por %p42, %p43
    %s46 = sadd.s32 %s45, 1
    %p49 = scmp.eq.s32.totalorder %s11, 1
    %p50 = scmp.ne.s32.totalorder %s45, %s47
    %p51 = scmp.eq.s32.totalorder %s11, 0
    %p52 = por %p50, %p51
    %p53 = scmp.ne.s32.totalorder %s45, %s47
    %p54 = scmp.eq.s32.totalorder %s16, 1
    %p55 = por %p53, %p54
    %p56 = scmp.ne.s32.totalorder %s47, %s48
    %p57 = scmp.eq.s32.totalorder %s16, 0
    %p58 = por %p56, %p57
    %p59 = scmp.ne.s32.totalorder %s47, %s48
    %p60 = scmp.eq.s32.totalorder %s17, 1
    %p61 = por %p59, %p60
    %p63 = scmp.ne.s32.totalorder %s48, %s62
    %p64 = scmp.eq.s32.totalorder %s17, 0
    %p65 = por %p63, %p64
    %s67 = sadd.s32 %s66, 1
    %p70 = scmp.eq.s32.totalorder %s11, 1
    %p71 = scmp.ne.s32.totalorder %s66, %s68
    %p72 = scmp.eq.s32.totalorder %s11, 0
    %p73 = por %p71, %p72
    %p74 = scmp.ne.s32.totalorder %s66, %s68
    %p75 = scmp.eq.s32.totalorder %s16, 1
    %p76 = por %p74, %p75
    %p77 = scmp.ne.s32.totalorder %s68, %s69
    %p78 = scmp.eq.s32.totalorder %s16, 0
    %p79 = por %p77, %p78
    %p80 = scmp.ne.s32.totalorder %s68, %s69
    %p81 = scmp.eq.s32.totalorder %s17, 1
    %p82 = por %p80, %p81
    %p84 = scmp.ne.s32.totalorder %s69, %s83
    %p85 = scmp.eq.s32.totalorder %s17, 0
    %p86 = por %p84, %p85
    %s88 = sadd.s32 %s87, 1
    %p91 = scmp.eq.s32.totalorder %s11, 1
    %p92 = scmp.ne.s32.totalorder %s87, %s89
    %p93 = scmp.eq.s32.totalorder %s11, 0
    %p94 = por %p92, %p93
    %p95 = scmp.ne.s32.totalorder %s87, %s89
    %p96 = scmp.eq.s32.totalorder %s16, 1
    %p97 = por %p95, %p96
    %p98 = scmp.ne.s32.totalorder %s89, %s90
    %p99 = scmp.eq.s32.totalorder %s16, 0
    %p100 = por %p98, %p99
    %p101 = scmp.ne.s32.totalorder %s89, %s90
    %p102 = scmp.eq.s32.totalorder %s17, 1
    %p103 = por %p101, %p102
    %p105 = scmp.ne.s32.totalorder %s90, %s104
    %p106 = scmp.eq.s32.totalorder %s17, 0
    %p107 = por %p105, %p106
    %s109 = sadd.s32 %s108, 1
    %p112 = scmp.eq.s32.totalorder %s11, 1
    %p113 = scmp.ne.s32.totalorder %s108, %s110
    %p114 = scmp.eq.s32.totalorder %s11, 0
    %p115 = por %p113, %p114
    %p116 = scmp.ne.s32.totalorder %s108, %s110
    %p117 = scmp.eq.s32.totalorder %s16, 1
    %p118 = por %p116, %p117
    %p119 = scmp.ne.s32.totalorder %s110, %s111
    %p120 = scmp.eq.s32.totalorder %s16, 0
    %p121 = por %p119, %p120
    %p122 = scmp.ne.s32.totalorder %s110, %s111
    %p123 = scmp.eq.s32.totalorder %s17, 1
    %p124 = por %p122, %p123
    %p126 = scmp.ne.s32.totalorder %s111, %s125
    %p127 = scmp.eq.s32.totalorder %s17, 0
    %p128 = por %p126, %p127
    %s129 = ssub.s32 %s11, %s18
    %p130 = scmp.eq.s32.totalorder %s129, 0
    %s132 = sadd.s32 %s131, 1
    %s133 = scalar_select %p130, %s131, %s132
    %p136 = pneg %p130
    %p137 = scmp.eq.s32.totalorder %s11, 1
    %p138 = por %p136, %p137
    %p139 = scmp.ne.s32.totalorder %s131, %s134
    %p140 = scmp.eq.s32.totalorder %s11, 0
    %p141 = por %p139, %p140
    %p142 = scmp.ne.s32.totalorder %s131, %s134
    %p143 = scmp.eq.s32.totalorder %s16, 1
    %p144 = por %p142, %p143
    %p145 = scmp.ne.s32.totalorder %s134, %s135
    %p146 = scmp.eq.s32.totalorder %s16, 0
    %p147 = por %p145, %p146
    %p148 = scmp.ne.s32.totalorder %s134, %s135
    %p149 = scmp.eq.s32.totalorder %s17, 1
    %p150 = por %p148, %p149
    %p152 = scmp.ne.s32.totalorder %s135, %s151
    %p153 = scmp.eq.s32.totalorder %s17, 0
    %p154 = por %p152, %p153
    %p155 = scmp.le.s32.totalorder 1, %s11
    %p156 = scmp.lt.s32.totalorder %s11, 3
    %p157 = pnand %p155, %p156
    %p158 = pneg %p157
    // Predicated region
    $region9: #{basic_block_forward.1} parent=5 // pred_check
      _
    $region10: #{basic_block_forward.1} parent=5 // pred_check_branch
      %160 = sbr.rel (%p157) target = $region12
    $region11: #{basic_block_forward.1} parent=5 // pred_region
      %s161 = ssub.s32 %s11, 1
      // Predicated region
      $region13: #{basic_block_forward.1} parent=11 // pred_check
        %p162 = pneg %p58
      $region14: #{basic_block_forward.1} parent=11 // pred_check_branch
        %164 = sbr.rel (%p162) target = $region16
      $region15: #{basic_block_forward.1} parent=11 // pred_region
        _
      $region16: #{basic_block_forward.1} parent=11 // pred_fallthru
        _
      // Predicated region
      $region17: #{basic_block_forward.1} parent=11 // pred_check
        %p165 = pneg %p79
      $region18: #{basic_block_forward.1} parent=11 // pred_check_branch
        %167 = sbr.rel (%p165) target = $region20
      $region19: #{basic_block_forward.1} parent=11 // pred_region
        _
      $region20: #{basic_block_forward.1} parent=11 // pred_fallthru
        _
      // Predicated region
      $region21: #{basic_block_forward.1} parent=11 // pred_check
        %p168 = pneg %p100
      $region22: #{basic_block_forward.1} parent=11 // pred_check_branch
        %170 = sbr.rel (%p168) target = $region24
      $region23: #{basic_block_forward.1} parent=11 // pred_region
        _
      $region24: #{basic_block_forward.1} parent=11 // pred_fallthru
        _
      // Predicated region
      $region25: #{basic_block_forward.1} parent=11 // pred_check
        %p171 = pneg %p121
      $region26: #{basic_block_forward.1} parent=11 // pred_check_branch
        %173 = sbr.rel (%p171) target = $region28
      $region27: #{basic_block_forward.1} parent=11 // pred_region
        _
      $region28: #{basic_block_forward.1} parent=11 // pred_fallthru
        _
    $region12: #{basic_block_forward.1} parent=5 // pred_fallthru
      _
    %p174 = scmp.lt.s32.totalorder %s11, 2
    // Predicated region
    $region29: #{basic_block_forward.1} parent=5 // pred_check
      %p175 = pneg %p174
    $region30: #{basic_block_forward.1} parent=5 // pred_check_branch
      %177 = sbr.rel (%p175) target = $region32
    $region31: #{basic_block_forward.1} parent=5 // pred_region
      // Predicated region
      $region33: #{basic_block_forward.1} parent=31 // pred_check
        %p178 = pneg %p31
      $region34: #{basic_block_forward.1} parent=31 // pred_check_branch
        %180 = sbr.rel (%p178) target = $region36
      $region35: #{basic_block_forward.1} parent=31 // pred_region
        %p181 = scmp.lt.s32.totalorder %s11, 1
        %s182 = scalar_select %p181, %s11, 1
        %s183 = smul.addr %s182, 2
        %s184 = smul.addr %s183, 8
        %s185 = scalar_lea.vmem %s0, %s184
      $region36: #{basic_block_forward.1} parent=31 // pred_fallthru
        _
    $region32: #{basic_block_forward.1} parent=5 // pred_fallthru
      _
    %p186 = scmp.le.s32.totalorder 1, %s11
    %p187 = scmp.lt.s32.totalorder %s11, 3
    %p188 = pnand %p186, %p187
    %p189 = pneg %p188
    // Predicated region
    $region37: #{basic_block_forward.1} parent=5 // pred_check
      _
    $region38: #{basic_block_forward.1} parent=5 // pred_check_branch
      %191 = sbr.rel (%p188) target = $region40
    $region39: #{basic_block_forward.1} parent=5 // pred_region
      %s192 = ssub.s32 %s11, 1
      %p193 = scmp.lt.s32.totalorder %s16, 1
      %s194 = scalar_select %p193, %s16, 1
      %s195 = smul.addr %s194, 2
      %s196 = smul.addr %s195, 8
      %s197 = scalar_lea.vmem %s0, %s196
      %p198 = pneg %p37
      %p199 = pneg %p34
      %p200 = pneg %p58
      %p201 = pneg %p55
      %p202 = pneg %p79
      %p203 = pneg %p76
      %p204 = pneg %p100
      %p205 = pneg %p97
      %p206 = pneg %p121
      %p207 = pneg %p118
      %p208 = pneg %p147
      %p209 = pneg %p144
      %p210 = scmp.lt.s32.totalorder %s16, 1
      %s211 = scalar_select %p210, %s16, 1
      %s212 = smul.addr %s211, 2
      %s213 = smul.addr %s212, 8
      %s214 = scalar_lea.vmem %s5, %s213
      %p215 = scmp.lt.s32.totalorder %s16, 1
      %s216 = scalar_select %p215, %s16, 1
      %s217 = smul.addr %s216, 2
      %s218 = smul.addr %s217, 8
      %s219 = scalar_lea.vmem %s0, %s218
      %p220 = scmp.lt.s32.totalorder %s16, 1
      %s221 = scalar_select %p220, %s16, 1
      %s222 = smul.addr %s221, 2
      %s223 = smul.addr %s222, 8
      %s224 = scalar_lea.vmem %s5, %s223
      %v225 = vld [vmem:[%s219] sm:$0xff]
      %v226 = vld [vmem:[%s219 + $0x8] sm:$0xff]
      %227 = vst [vmem:[#allocation2] sm:$0xff] 0.0
      %228 = vst [vmem:[#allocation2 + $0x8] sm:$0xff] 0.0
      %229 = vst [vmem:[#allocation2 + $0x10] sm:$0x3] 0.0
      %230 = vst [vmem:[#allocation2 + $0x1] sm:$0xff] %v225
      %231 = vst [vmem:[#allocation2 + $0x9] sm:$0xff] %v226
      %v232 = vld [vmem:[#allocation2] sm:$0xff]
      %v233 = vld [vmem:[#allocation2 + $0x8] sm:$0xff]
      %v234 = vld [vmem:[%s1] sm:$0xff]
      %v235 = vld [vmem:[%s1 + $0x8] sm:$0xff]
      %v236 = vld [vmem:[%s1 + $0x10] sm:$0xff]
      %v237 = vld [vmem:[%s1 + $0x18] sm:$0xff]
      %v238 = vld [vmem:[%s1 + $0x20] sm:$0xff]
      %v239 = vld [vmem:[%s1 + $0x28] sm:$0xff]
      %v240 = vld [vmem:[%s1 + $0x30] sm:$0xff]
      %v241 = vld [vmem:[%s1 + $0x38] sm:$0xff]
      %v242 = vld [vmem:[%s1 + $0x40] sm:$0xff]
      %v243 = vld [vmem:[%s1 + $0x48] sm:$0xff]
      %v244 = vld [vmem:[%s1 + $0x50] sm:$0xff]
      %v245 = vld [vmem:[%s1 + $0x58] sm:$0xff]
      %v246 = vld [vmem:[%s1 + $0x60] sm:$0xff]
      %v247 = vld [vmem:[%s1 + $0x68] sm:$0xff]
      %v248 = vld [vmem:[%s1 + $0x70] sm:$0xff]
      %v249 = vld [vmem:[%s1 + $0x78] sm:$0xff]
      %v250 = vld [vmem:[#allocation2 + $0x1] sm:$0xff]
      %v251 = vld [vmem:[#allocation2 + $0x9] sm:$0xff]
      %s252 = scalar_lea.vmem %s1, 128
      %v253 = vld [vmem:[%s252] sm:$0xff]
      %v254 = vld [vmem:[%s252 + $0x8] sm:$0xff]
      %v255 = vld [vmem:[%s252 + $0x10] sm:$0xff]
      %v256 = vld [vmem:[%s252 + $0x18] sm:$0xff]
      %v257 = vld [vmem:[%s252 + $0x20] sm:$0xff]
      %v258 = vld [vmem:[%s252 + $0x28] sm:$0xff]
      %v259 = vld [vmem:[%s252 + $0x30] sm:$0xff]
      %v260 = vld [vmem:[%s252 + $0x38] sm:$0xff]
      %v261 = vld [vmem:[%s252 + $0x40] sm:$0xff]
      %v262 = vld [vmem:[%s252 + $0x48] sm:$0xff]
      %v263 = vld [vmem:[%s252 + $0x50] sm:$0xff]
      %v264 = vld [vmem:[%s252 + $0x58] sm:$0xff]
      %v265 = vld [vmem:[%s252 + $0x60] sm:$0xff]
      %v266 = vld [vmem:[%s252 + $0x68] sm:$0xff]
      %v267 = vld [vmem:[%s252 + $0x70] sm:$0xff]
      %v268 = vld [vmem:[%s252 + $0x78] sm:$0xff]
      %269 = vmatprep.subr.mxu0 0.0
      %270 = vmatpush1.msra.mxu0 %v268
      %271 = vmatprep.subr.mxu0 0.0
      %272 = vmatpush1.msra.mxu0 %v267
      %273 = vmatprep.subr.mxu0 0.0
      %274 = vmatpush1.msra.mxu0 %v266
      %275 = vmatprep.subr.mxu0 0.0
      %276 = vmatpush1.msra.mxu0 %v265
      %277 = vmatprep.subr.mxu0 0.0
      %278 = vmatpush1.msra.mxu0 %v264
      %279 = vmatprep.subr.mxu0 0.0
      %280 = vmatpush1.msra.mxu0 %v263
      %281 = vmatprep.subr.mxu0 0.0
      %282 = vmatpush1.msra.mxu0 %v262
      %283 = vmatprep.subr.mxu0 0.0
      %284 = vmatpush1.msra.mxu0 %v261
      %285 = vmatprep.subr.mxu0 0.0
      %286 = vmatpush1.msra.mxu0 %v260
      %287 = vmatprep.subr.mxu0 0.0
      %288 = vmatpush1.msra.mxu0 %v259
      %289 = vmatprep.subr.mxu0 0.0
      %290 = vmatpush1.msra.mxu0 %v258
      %291 = vmatprep.subr.mxu0 0.0
      %292 = vmatpush1.msra.mxu0 %v257
      %293 = vmatprep.subr.mxu0 0.0
      %294 = vmatpush1.msra.mxu0 %v256
      %295 = vmatprep.subr.mxu0 0.0
      %296 = vmatpush1.msra.mxu0 %v255
      %297 = vmatprep.subr.mxu0 0.0
      %298 = vmatpush1.msra.mxu0 %v254
      %299 = vmatprep.subr.mxu0 0.0
      %300 = vmatpush1.msra.mxu0 %v253
      %301 = vmatprep.subr.mxu0 0.0
      %302 = vmatpush2.msra.mxu0 0.0
      %303 = vmatprep.subr.mxu0 0.0
      %304 = vmatpush2.msra.mxu0 0.0
      %305 = vmatprep.subr.mxu0 0.0
      %306 = vmatpush2.msra.mxu0 0.0
      %307 = vmatprep.subr.mxu0 0.0
      %308 = vmatpush2.msra.mxu0 0.0
      %309 = vmatprep.subr.mxu0 0.0
      %310 = vmatpush2.msra.mxu0 0.0
      %311 = vmatprep.subr.mxu0 0.0
      %312 = vmatpush2.msra.mxu0 0.0
      %313 = vmatprep.subr.mxu0 0.0
      %314 = vmatpush2.msra.mxu0 0.0
      %315 = vmatprep.subr.mxu0 0.0
      %316 = vmatpush2.msra.mxu0 0.0
      %317 = vmatprep.subr.mxu0 0.0
      %318 = vmatpush2.msra.mxu0 0.0
      %319 = vmatprep.subr.mxu0 0.0
      %320 = vmatpush2.msra.mxu0 0.0
      %321 = vmatprep.subr.mxu0 0.0
      %322 = vmatpush2.msra.mxu0 0.0
      %323 = vmatprep.subr.mxu0 0.0
      %324 = vmatpush2.msra.mxu0 0.0
      %325 = vmatprep.subr.mxu0 0.0
      %326 = vmatpush2.msra.mxu0 0.0
      %327 = vmatprep.subr.mxu0 0.0
      %328 = vmatpush2.msra.mxu0 0.0
      %329 = vmatprep.subr.mxu0 0.0
      %330 = vmatpush2.msra.mxu0 0.0
      %331 = vmatprep.subr.mxu0 0.0
      %332 = vmatpush2.msra.mxu0 0.0
      %333 = vmatprep.mubr.f32.mxu0 0.0
      %334 = vmatmul.mubr.f32.gmra.mxu0 %v250
      %v335 = vpop.f32.mrf.mxu0
      %v336 = vadd.f32 0.0, %v335
      %v337 = vpop.f32.mrf.mxu0
      %338 = vmatprep.mubr.f32.mxu0 0.0
      %339 = vmatmul.mubr.f32.gmra.mxu0 %v251
      %v340 = vpop.f32.mrf.mxu0
      %v341 = vadd.f32 0.0, %v340
      %v342 = vpop.f32.mrf.mxu0
      %343 = vdwg.mxu0
      %344 = vmatprep.subr.mxu0 0.0
      %345 = vmatpush1.msra.mxu0 %v249
      %346 = vmatprep.subr.mxu0 0.0
      %347 = vmatpush1.msra.mxu0 %v248
      %348 = vmatprep.subr.mxu0 0.0
      %349 = vmatpush1.msra.mxu0 %v247
      %350 = vmatprep.subr.mxu0 0.0
      %351 = vmatpush1.msra.mxu0 %v246
      %352 = vmatprep.subr.mxu0 0.0
      %353 = vmatpush1.msra.mxu0 %v245
      %354 = vmatprep.subr.mxu0 0.0
      %355 = vmatpush1.msra.mxu0 %v244
      %356 = vmatprep.subr.mxu0 0.0
      %357 = vmatpush1.msra.mxu0 %v243
      %358 = vmatprep.subr.mxu0 0.0
      %359 = vmatpush1.msra.mxu0 %v242
      %360 = vmatprep.subr.mxu0 0.0
      %361 = vmatpush1.msra.mxu0 %v241
      %362 = vmatprep.subr.mxu0 0.0
      %363 = vmatpush1.msra.mxu0 %v240
      %364 = vmatprep.subr.mxu0 0.0
      %365 = vmatpush1.msra.mxu0 %v239
      %366 = vmatprep.subr.mxu0 0.0
      %367 = vmatpush1.msra.mxu0 %v238
      %368 = vmatprep.subr.mxu0 0.0
      %369 = vmatpush1.msra.mxu0 %v237
      %370 = vmatprep.subr.mxu0 0.0
      %371 = vmatpush1.msra.mxu0 %v236
      %372 = vmatprep.subr.mxu0 0.0
      %373 = vmatpush1.msra.mxu0 %v235
      %374 = vmatprep.subr.mxu0 0.0
      %375 = vmatpush1.msra.mxu0 %v234
      %376 = vmatprep.subr.mxu0 0.0
      %377 = vmatpush2.msra.mxu0 0.0
      %378 = vmatprep.subr.mxu0 0.0
      %379 = vmatpush2.msra.mxu0 0.0
      %380 = vmatprep.subr.mxu0 0.0
      %381 = vmatpush2.msra.mxu0 0.0
      %382 = vmatprep.subr.mxu0 0.0
      %383 = vmatpush2.msra.mxu0 0.0
      %384 = vmatprep.subr.mxu0 0.0
      %385 = vmatpush2.msra.mxu0 0.0
      %386 = vmatprep.subr.mxu0 0.0
      %387 = vmatpush2.msra.mxu0 0.0
      %388 = vmatprep.subr.mxu0 0.0
      %389 = vmatpush2.msra.mxu0 0.0
      %390 = vmatprep.subr.mxu0 0.0
      %391 = vmatpush2.msra.mxu0 0.0
      %392 = vmatprep.subr.mxu0 0.0
      %393 = vmatpush2.msra.mxu0 0.0
      %394 = vmatprep.subr.mxu0 0.0
      %395 = vmatpush2.msra.mxu0 0.0
      %396 = vmatprep.subr.mxu0 0.0
      %397 = vmatpush2.msra.mxu0 0.0
      %398 = vmatprep.subr.mxu0 0.0
      %399 = vmatpush2.msra.mxu0 0.0
      %400 = vmatprep.subr.mxu0 0.0
      %401 = vmatpush2.msra.mxu0 0.0
      %402 = vmatprep.subr.mxu0 0.0
      %403 = vmatpush2.msra.mxu0 0.0
      %404 = vmatprep.subr.mxu0 0.0
      %405 = vmatpush2.msra.mxu0 0.0
      %406 = vmatprep.subr.mxu0 0.0
      %407 = vmatpush2.msra.mxu0 0.0
      %408 = vmatprep.mubr.f32.mxu0 0.0
      %409 = vmatmul.mubr.f32.gmra.mxu0 %v232
      %v410 = vpop.f32.mrf.mxu0
      %v411 = vadd.f32 %v336, %v410
      %v412 = vpop.f32.mrf.mxu0
      %413 = vmatprep.mubr.f32.mxu0 0.0
      %414 = vmatmul.mubr.f32.gmra.mxu0 %v233
      %v415 = vpop.f32.mrf.mxu0
      %v416 = vadd.f32 %v341, %v415
      %v417 = vpop.f32.mrf.mxu0
      %418 = vdwg.mxu0
      %v419 = vld [vmem:[#allocation2 + $0x2] sm:$0xff]
      %v420 = vld [vmem:[#allocation2 + $0xa] sm:$0xff]
      %s421 = scalar_lea.vmem %s1, 256
      %v422 = vld [vmem:[%s421] sm:$0xff]
      %v423 = vld [vmem:[%s421 + $0x8] sm:$0xff]
      %v424 = vld [vmem:[%s421 + $0x10] sm:$0xff]
      %v425 = vld [vmem:[%s421 + $0x18] sm:$0xff]
      %v426 = vld [vmem:[%s421 + $0x20] sm:$0xff]
      %v427 = vld [vmem:[%s421 + $0x28] sm:$0xff]
      %v428 = vld [vmem:[%s421 + $0x30] sm:$0xff]
      %v429 = vld [vmem:[%s421 + $0x38] sm:$0xff]
      %v430 = vld [vmem:[%s421 + $0x40] sm:$0xff]
      %v431 = vld [vmem:[%s421 + $0x48] sm:$0xff]
      %v432 = vld [vmem:[%s421 + $0x50] sm:$0xff]
      %v433 = vld [vmem:[%s421 + $0x58] sm:$0xff]
      %v434 = vld [vmem:[%s421 + $0x60] sm:$0xff]
      %v435 = vld [vmem:[%s421 + $0x68] sm:$0xff]
      %v436 = vld [vmem:[%s421 + $0x70] sm:$0xff]
      %v437 = vld [vmem:[%s421 + $0x78] sm:$0xff]
      %438 = vmatprep.subr.mxu0 0.0
      %439 = vmatpush1.msra.mxu0 %v437
      %440 = vmatprep.subr.mxu0 0.0
      %441 = vmatpush1.msra.mxu0 %v436
      %442 = vmatprep.subr.mxu0 0.0
      %443 = vmatpush1.msra.mxu0 %v435
      %444 = vmatprep.subr.mxu0 0.0
      %445 = vmatpush1.msra.mxu0 %v434
      %446 = vmatprep.subr.mxu0 0.0
      %447 = vmatpush1.msra.mxu0 %v433
      %448 = vmatprep.subr.mxu0 0.0
      %449 = vmatpush1.msra.mxu0 %v432
      %450 = vmatprep.subr.mxu0 0.0
      %451 = vmatpush1.msra.mxu0 %v431
      %452 = vmatprep.subr.mxu0 0.0
      %453 = vmatpush1.msra.mxu0 %v430
      %454 = vmatprep.subr.mxu0 0.0
      %455 = vmatpush1.msra.mxu0 %v429
      %456 = vmatprep.subr.mxu0 0.0
      %457 = vmatpush1.msra.mxu0 %v428
      %458 = vmatprep.subr.mxu0 0.0
      %459 = vmatpush1.msra.mxu0 %v427
      %460 = vmatprep.subr.mxu0 0.0
      %461 = vmatpush1.msra.mxu0 %v426
      %462 = vmatprep.subr.mxu0 0.0
      %463 = vmatpush1.msra.mxu0 %v425
      %464 = vmatprep.subr.mxu0 0.0
      %465 = vmatpush1.msra.mxu0 %v424
      %466 = vmatprep.subr.mxu0 0.0
      %467 = vmatpush1.msra.mxu0 %v423
      %468 = vmatprep.subr.mxu0 0.0
      %469 = vmatpush1.msra.mxu0 %v422
      %470 = vmatprep.subr.mxu0 0.0
      %471 = vmatpush2.msra.mxu0 0.0
      %472 = vmatprep.subr.mxu0 0.0
      %473 = vmatpush2.msra.mxu0 0.0
      %474 = vmatprep.subr.mxu0 0.0
      %475 = vmatpush2.msra.mxu0 0.0
      %476 = vmatprep.subr.mxu0 0.0
      %477 = vmatpush2.msra.mxu0 0.0
      %478 = vmatprep.subr.mxu0 0.0
      %479 = vmatpush2.msra.mxu0 0.0
      %480 = vmatprep.subr.mxu0 0.0
      %481 = vmatpush2.msra.mxu0 0.0
      %482 = vmatprep.subr.mxu0 0.0
      %483 = vmatpush2.msra.mxu0 0.0
      %484 = vmatprep.subr.mxu0 0.0
      %485 = vmatpush2.msra.mxu0 0.0
      %486 = vmatprep.subr.mxu0 0.0
      %487 = vmatpush2.msra.mxu0 0.0
      %488 = vmatprep.subr.mxu0 0.0
      %489 = vmatpush2.msra.mxu0 0.0
      %490 = vmatprep.subr.mxu0 0.0
      %491 = vmatpush2.msra.mxu0 0.0
      %492 = vmatprep.subr.mxu0 0.0
      %493 = vmatpush2.msra.mxu0 0.0
      %494 = vmatprep.subr.mxu0 0.0
      %495 = vmatpush2.msra.mxu0 0.0
      %496 = vmatprep.subr.mxu0 0.0
      %497 = vmatpush2.msra.mxu0 0.0
      %498 = vmatprep.subr.mxu0 0.0
      %499 = vmatpush2.msra.mxu0 0.0
      %500 = vmatprep.subr.mxu0 0.0
      %501 = vmatpush2.msra.mxu0 0.0
      %502 = vmatprep.mubr.f32.mxu0 0.0
      %503 = vmatmul.mubr.f32.gmra.mxu0 %v419
      %v504 = vpop.f32.mrf.mxu0
      %v505 = vadd.f32 0.0, %v504
      %v506 = vpop.f32.mrf.mxu0
      %507 = vmatprep.mubr.f32.mxu0 0.0
      %508 = vmatmul.mubr.f32.gmra.mxu0 %v420
      %v509 = vpop.f32.mrf.mxu0
      %v510 = vadd.f32 0.0, %v509
      %v511 = vpop.f32.mrf.mxu0
      %512 = vdwg.mxu0
      %v513 = vadd.f32 %v411, %v505
      %v514 = vadd.f32 %v416, %v510
      %v515 = vld [vmem:[%s2] sm:$0x1]
      %v517 = vlaneseq
      %v518 = vshrl.u32 %v517, 7
      %v519 = vsub.s32 0, %v518
      %v520 = vrot.slane %v515, %v519
      %v522 = vadd.f32 %v513, %v520
      %v523 = vadd.f32 %v514, %v520
      %v524 = vmax.f32 %v522, 0.0
      %v525 = vmax.f32 %v523, 0.0
      %526 = vst [vmem:[#allocation3] sm:$0xff] 0.0
      %527 = vst [vmem:[#allocation3 + $0x8] sm:$0xff] 0.0
      %528 = vst [vmem:[#allocation3 + $0x10] sm:$0x3] 0.0
      %529 = vst [vmem:[#allocation3 + $0x1] sm:$0xff] %v524
      %530 = vst [vmem:[#allocation3 + $0x9] sm:$0xff] %v525
      %v531 = vld [vmem:[#allocation3] sm:$0xff]
      %v532 = vld [vmem:[#allocation3 + $0x8] sm:$0xff]
      %v533 = vld [vmem:[%s3] sm:$0xff]
      %v534 = vld [vmem:[%s3 + $0x8] sm:$0xff]
      %v535 = vld [vmem:[%s3 + $0x10] sm:$0xff]
      %v536 = vld [vmem:[%s3 + $0x18] sm:$0xff]
      %v537 = vld [vmem:[%s3 + $0x20] sm:$0xff]
      %v538 = vld [vmem:[%s3 + $0x28] sm:$0xff]
      %v539 = vld [vmem:[%s3 + $0x30] sm:$0xff]
      %v540 = vld [vmem:[%s3 + $0x38] sm:$0xff]
      %v541 = vld [vmem:[%s3 + $0x40] sm:$0xff]
      %v542 = vld [vmem:[%s3 + $0x48] sm:$0xff]
      %v543 = vld [vmem:[%s3 + $0x50] sm:$0xff]
      %v544 = vld [vmem:[%s3 + $0x58] sm:$0xff]
      %v545 = vld [vmem:[%s3 + $0x60] sm:$0xff]
      %v546 = vld [vmem:[%s3 + $0x68] sm:$0xff]
      %v547 = vld [vmem:[%s3 + $0x70] sm:$0xff]
      %v548 = vld [vmem:[%s3 + $0x78] sm:$0xff]
      %v549 = vld [vmem:[#allocation3 + $0x1] sm:$0xff]
      %v550 = vld [vmem:[#allocation3 + $0x9] sm:$0xff]
      %s551 = scalar_lea.vmem %s3, 128
      %v552 = vld [vmem:[%s551] sm:$0xff]
      %v553 = vld [vmem:[%s551 + $0x8] sm:$0xff]
      %v554 = vld [vmem:[%s551 + $0x10] sm:$0xff]
      %v555 = vld [vmem:[%s551 + $0x18] sm:$0xff]
      %v556 = vld [vmem:[%s551 + $0x20] sm:$0xff]
      %v557 = vld [vmem:[%s551 + $0x28] sm:$0xff]
      %v558 = vld [vmem:[%s551 + $0x30] sm:$0xff]
      %v559 = vld [vmem:[%s551 + $0x38] sm:$0xff]
      %v560 = vld [vmem:[%s551 + $0x40] sm:$0xff]
      %v561 = vld [vmem:[%s551 + $0x48] sm:$0xff]
      %v562 = vld [vmem:[%s551 + $0x50] sm:$0xff]
      %v563 = vld [vmem:[%s551 + $0x58] sm:$0xff]
      %v564 = vld [vmem:[%s551 + $0x60] sm:$0xff]
      %v565 = vld [vmem:[%s551 + $0x68] sm:$0xff]
      %v566 = vld [vmem:[%s551 + $0x70] sm:$0xff]
      %v567 = vld [vmem:[%s551 + $0x78] sm:$0xff]
      %568 = vmatprep.subr.mxu0 0.0
      %569 = vmatpush1.msra.mxu0 %v567
      %570 = vmatprep.subr.mxu0 0.0
      %571 = vmatpush1.msra.mxu0 %v566
      %572 = vmatprep.subr.mxu0 0.0
      %573 = vmatpush1.msra.mxu0 %v565
      %574 = vmatprep.subr.mxu0 0.0
      %575 = vmatpush1.msra.mxu0 %v564
      %576 = vmatprep.subr.mxu0 0.0
      %577 = vmatpush1.msra.mxu0 %v563
      %578 = vmatprep.subr.mxu0 0.0
      %579 = vmatpush1.msra.mxu0 %v562
      %580 = vmatprep.subr.mxu0 0.0
      %581 = vmatpush1.msra.mxu0 %v561
      %582 = vmatprep.subr.mxu0 0.0
      %583 = vmatpush1.msra.mxu0 %v560
      %584 = vmatprep.subr.mxu0 0.0
      %585 = vmatpush1.msra.mxu0 %v559
      %586 = vmatprep.subr.mxu0 0.0
      %587 = vmatpush1.msra.mxu0 %v558
      %588 = vmatprep.subr.mxu0 0.0
      %589 = vmatpush1.msra.mxu0 %v557
      %590 = vmatprep.subr.mxu0 0.0
      %591 = vmatpush1.msra.mxu0 %v556
      %592 = vmatprep.subr.mxu0 0.0
      %593 = vmatpush1.msra.mxu0 %v555
      %594 = vmatprep.subr.mxu0 0.0
      %595 = vmatpush1.msra.mxu0 %v554
      %596 = vmatprep.subr.mxu0 0.0
      %597 = vmatpush1.msra.mxu0 %v553
      %598 = vmatprep.subr.mxu0 0.0
      %599 = vmatpush1.msra.mxu0 %v552
      %600 = vmatprep.subr.mxu0 0.0
      %601 = vmatpush2.msra.mxu0 0.0
      %602 = vmatprep.subr.mxu0 0.0
      %603 = vmatpush2.msra.mxu0 0.0
      %604 = vmatprep.subr.mxu0 0.0
      %605 = vmatpush2.msra.mxu0 0.0
      %606 = vmatprep.subr.mxu0 0.0
      %607 = vmatpush2.msra.mxu0 0.0
      %608 = vmatprep.subr.mxu0 0.0
      %609 = vmatpush2.msra.mxu0 0.0
      %610 = vmatprep.subr.mxu0 0.0
      %611 = vmatpush2.msra.mxu0 0.0
      %612 = vmatprep.subr.mxu0 0.0
      %613 = vmatpush2.msra.mxu0 0.0
      %614 = vmatprep.subr.mxu0 0.0
      %615 = vmatpush2.msra.mxu0 0.0
      %616 = vmatprep.subr.mxu0 0.0
      %617 = vmatpush2.msra.mxu0 0.0
      %618 = vmatprep.subr.mxu0 0.0
      %619 = vmatpush2.msra.mxu0 0.0
      %620 = vmatprep.subr.mxu0 0.0
      %621 = vmatpush2.msra.mxu0 0.0
      %622 = vmatprep.subr.mxu0 0.0
      %623 = vmatpush2.msra.mxu0 0.0
      %624 = vmatprep.subr.mxu0 0.0
      %625 = vmatpush2.msra.mxu0 0.0
      %626 = vmatprep.subr.mxu0 0.0
      %627 = vmatpush2.msra.mxu0 0.0
      %628 = vmatprep.subr.mxu0 0.0
      %629 = vmatpush2.msra.mxu0 0.0
      %630 = vmatprep.subr.mxu0 0.0
      %631 = vmatpush2.msra.mxu0 0.0
      %632 = vmatprep.mubr.f32.mxu0 0.0
      %633 = vmatmul.mubr.f32.gmra.mxu0 %v549
      %v634 = vpop.f32.mrf.mxu0
      %v635 = vadd.f32 0.0, %v634
      %v636 = vpop.f32.mrf.mxu0
      %637 = vmatprep.mubr.f32.mxu0 0.0
      %638 = vmatmul.mubr.f32.gmra.mxu0 %v550
      %v639 = vpop.f32.mrf.mxu0
      %v640 = vadd.f32 0.0, %v639
      %v641 = vpop.f32.mrf.mxu0
      %642 = vdwg.mxu0
      %643 = vmatprep.subr.mxu0 0.0
      %644 = vmatpush1.msra.mxu0 %v548
      %645 = vmatprep.subr.mxu0 0.0
      %646 = vmatpush1.msra.mxu0 %v547
      %647 = vmatprep.subr.mxu0 0.0
      %648 = vmatpush1.msra.mxu0 %v546
      %649 = vmatprep.subr.mxu0 0.0
      %650 = vmatpush1.msra.mxu0 %v545
      %651 = vmatprep.subr.mxu0 0.0
      %652 = vmatpush1.msra.mxu0 %v544
      %653 = vmatprep.subr.mxu0 0.0
      %654 = vmatpush1.msra.mxu0 %v543
      %655 = vmatprep.subr.mxu0 0.0
      %656 = vmatpush1.msra.mxu0 %v542
      %657 = vmatprep.subr.mxu0 0.0
      %658 = vmatpush1.msra.mxu0 %v541
      %659 = vmatprep.subr.mxu0 0.0
      %660 = vmatpush1.msra.mxu0 %v540
      %661 = vmatprep.subr.mxu0 0.0
      %662 = vmatpush1.msra.mxu0 %v539
      %663 = vmatprep.subr.mxu0 0.0
      %664 = vmatpush1.msra.mxu0 %v538
      %665 = vmatprep.subr.mxu0 0.0
      %666 = vmatpush1.msra.mxu0 %v537
      %667 = vmatprep.subr.mxu0 0.0
      %668 = vmatpush1.msra.mxu0 %v536
      %669 = vmatprep.subr.mxu0 0.0
      %670 = vmatpush1.msra.mxu0 %v535
      %671 = vmatprep.subr.mxu0 0.0
      %672 = vmatpush1.msra.mxu0 %v534
      %673 = vmatprep.subr.mxu0 0.0
      %674 = vmatpush1.msra.mxu0 %v533
      %675 = vmatprep.subr.mxu0 0.0
      %676 = vmatpush2.msra.mxu0 0.0
      %677 = vmatprep.subr.mxu0 0.0
      %678 = vmatpush2.msra.mxu0 0.0
      %679 = vmatprep.subr.mxu0 0.0
      %680 = vmatpush2.msra.mxu0 0.0
      %681 = vmatprep.subr.mxu0 0.0
      %682 = vmatpush2.msra.mxu0 0.0
      %683 = vmatprep.subr.mxu0 0.0
      %684 = vmatpush2.msra.mxu0 0.0
      %685 = vmatprep.subr.mxu0 0.0
      %686 = vmatpush2.msra.mxu0 0.0
      %687 = vmatprep.subr.mxu0 0.0
      %688 = vmatpush2.msra.mxu0 0.0
      %689 = vmatprep.subr.mxu0 0.0
      %690 = vmatpush2.msra.mxu0 0.0
      %691 = vmatprep.subr.mxu0 0.0
      %692 = vmatpush2.msra.mxu0 0.0
      %693 = vmatprep.subr.mxu0 0.0
      %694 = vmatpush2.msra.mxu0 0.0
      %695 = vmatprep.subr.mxu0 0.0
      %696 = vmatpush2.msra.mxu0 0.0
      %697 = vmatprep.subr.mxu0 0.0
      %698 = vmatpush2.msra.mxu0 0.0
      %699 = vmatprep.subr.mxu0 0.0
      %700 = vmatpush2.msra.mxu0 0.0
      %701 = vmatprep.subr.mxu0 0.0
      %702 = vmatpush2.msra.mxu0 0.0
      %703 = vmatprep.subr.mxu0 0.0
      %704 = vmatpush2.msra.mxu0 0.0
      %705 = vmatprep.subr.mxu0 0.0
      %706 = vmatpush2.msra.mxu0 0.0
      %707 = vmatprep.mubr.f32.mxu0 0.0
      %708 = vmatmul.mubr.f32.gmra.mxu0 %v531
      %v709 = vpop.f32.mrf.mxu0
      %v710 = vadd.f32 %v635, %v709
      %v711 = vpop.f32.mrf.mxu0
      %712 = vmatprep.mubr.f32.mxu0 0.0
      %713 = vmatmul.mubr.f32.gmra.mxu0 %v532
      %v714 = vpop.f32.mrf.mxu0
      %v715 = vadd.f32 %v640, %v714
      %v716 = vpop.f32.mrf.mxu0
      %717 = vdwg.mxu0
      %v718 = vld [vmem:[#allocation3 + $0x2] sm:$0xff]
      %v719 = vld [vmem:[#allocation3 + $0xa] sm:$0xff]
      %s720 = scalar_lea.vmem %s3, 256
      %v721 = vld [vmem:[%s720] sm:$0xff]
      %v722 = vld [vmem:[%s720 + $0x8] sm:$0xff]
      %v723 = vld [vmem:[%s720 + $0x10] sm:$0xff]
      %v724 = vld [vmem:[%s720 + $0x18] sm:$0xff]
      %v725 = vld [vmem:[%s720 + $0x20] sm:$0xff]
      %v726 = vld [vmem:[%s720 + $0x28] sm:$0xff]
      %v727 = vld [vmem:[%s720 + $0x30] sm:$0xff]
      %v728 = vld [vmem:[%s720 + $0x38] sm:$0xff]
      %v729 = vld [vmem:[%s720 + $0x40] sm:$0xff]
      %v730 = vld [vmem:[%s720 + $0x48] sm:$0xff]
      %v731 = vld [vmem:[%s720 + $0x50] sm:$0xff]
      %v732 = vld [vmem:[%s720 + $0x58] sm:$0xff]
      %v733 = vld [vmem:[%s720 + $0x60] sm:$0xff]
      %v734 = vld [vmem:[%s720 + $0x68] sm:$0xff]
      %v735 = vld [vmem:[%s720 + $0x70] sm:$0xff]
      %v736 = vld [vmem:[%s720 + $0x78] sm:$0xff]
      %737 = vmatprep.subr.mxu0 0.0
      %738 = vmatpush1.msra.mxu0 %v736
      %739 = vmatprep.subr.mxu0 0.0
      %740 = vmatpush1.msra.mxu0 %v735
      %741 = vmatprep.subr.mxu0 0.0
      %742 = vmatpush1.msra.mxu0 %v734
      %743 = vmatprep.subr.mxu0 0.0
      %744 = vmatpush1.msra.mxu0 %v733
      %745 = vmatprep.subr.mxu0 0.0
      %746 = vmatpush1.msra.mxu0 %v732
      %747 = vmatprep.subr.mxu0 0.0
      %748 = vmatpush1.msra.mxu0 %v731
      %749 = vmatprep.subr.mxu0 0.0
      %750 = vmatpush1.msra.mxu0 %v730
      %751 = vmatprep.subr.mxu0 0.0
      %752 = vmatpush1.msra.mxu0 %v729
      %753 = vmatprep.subr.mxu0 0.0
      %754 = vmatpush1.msra.mxu0 %v728
      %755 = vmatprep.subr.mxu0 0.0
      %756 = vmatpush1.msra.mxu0 %v727
      %757 = vmatprep.subr.mxu0 0.0
      %758 = vmatpush1.msra.mxu0 %v726
      %759 = vmatprep.subr.mxu0 0.0
      %760 = vmatpush1.msra.mxu0 %v725
      %761 = vmatprep.subr.mxu0 0.0
      %762 = vmatpush1.msra.mxu0 %v724
      %763 = vmatprep.subr.mxu0 0.0
      %764 = vmatpush1.msra.mxu0 %v723
      %765 = vmatprep.subr.mxu0 0.0
      %766 = vmatpush1.msra.mxu0 %v722
      %767 = vmatprep.subr.mxu0 0.0
      %768 = vmatpush1.msra.mxu0 %v721
      %769 = vmatprep.subr.mxu0 0.0
      %770 = vmatpush2.msra.mxu0 0.0
      %771 = vmatprep.subr.mxu0 0.0
      %772 = vmatpush2.msra.mxu0 0.0
      %773 = vmatprep.subr.mxu0 0.0
      %774 = vmatpush2.msra.mxu0 0.0
      %775 = vmatprep.subr.mxu0 0.0
      %776 = vmatpush2.msra.mxu0 0.0
      %777 = vmatprep.subr.mxu0 0.0
      %778 = vmatpush2.msra.mxu0 0.0
      %779 = vmatprep.subr.mxu0 0.0
      %780 = vmatpush2.msra.mxu0 0.0
      %781 = vmatprep.subr.mxu0 0.0
      %782 = vmatpush2.msra.mxu0 0.0
      %783 = vmatprep.subr.mxu0 0.0
      %784 = vmatpush2.msra.mxu0 0.0
      %785 = vmatprep.subr.mxu0 0.0
      %786 = vmatpush2.msra.mxu0 0.0
      %787 = vmatprep.subr.mxu0 0.0
      %788 = vmatpush2.msra.mxu0 0.0
      %789 = vmatprep.subr.mxu0 0.0
      %790 = vmatpush2.msra.mxu0 0.0
      %791 = vmatprep.subr.mxu0 0.0
      %792 = vmatpush2.msra.mxu0 0.0
      %793 = vmatprep.subr.mxu0 0.0
      %794 = vmatpush2.msra.mxu0 0.0
      %795 = vmatprep.subr.mxu0 0.0
      %796 = vmatpush2.msra.mxu0 0.0
      %797 = vmatprep.subr.mxu0 0.0
      %798 = vmatpush2.msra.mxu0 0.0
      %799 = vmatprep.subr.mxu0 0.0
      %800 = vmatpush2.msra.mxu0 0.0
      %801 = vmatprep.mubr.f32.mxu0 0.0
      %802 = vmatmul.mubr.f32.gmra.mxu0 %v718
      %v803 = vpop.f32.mrf.mxu0
      %v804 = vadd.f32 0.0, %v803
      %v805 = vpop.f32.mrf.mxu0
      %806 = vmatprep.mubr.f32.mxu0 0.0
      %807 = vmatmul.mubr.f32.gmra.mxu0 %v719
      %v808 = vpop.f32.mrf.mxu0
      %v809 = vadd.f32 0.0, %v808
      %v810 = vpop.f32.mrf.mxu0
      %811 = vdwg.mxu0
      %v812 = vadd.f32 %v710, %v804
      %v813 = vadd.f32 %v715, %v809
      %v814 = vld [vmem:[%s4] sm:$0x1]
      %v816 = vlaneseq
      %v817 = vshrl.u32 %v816, 7
      %v818 = vsub.s32 0, %v817
      %v819 = vrot.slane %v814, %v818
      %v821 = vadd.f32 %v812, %v819
      %v822 = vadd.f32 %v813, %v819
      %v823 = vadd.f32 %v821, %v225
      %v824 = vadd.f32 %v822, %v226
      %v825 = vmax.f32 %v823, 0.0
      %v826 = vmax.f32 %v824, 0.0
      %827 = vst [vmem:[%s224] sm:$0xff] %v825
      %828 = vst [vmem:[%s224 + $0x8] sm:$0xff] %v826
      %p829 = scmp.lt.s32.totalorder %s16, 1
      %s830 = scalar_select %p829, %s16, 1
      %s831 = smul.addr %s830, 2
      %s832 = smul.addr %s831, 8
      %s833 = scalar_lea.vmem %s5, %s832
      // Predicated region
      $region41: #{basic_block_forward.1} parent=39 // pred_check
        %p834 = pneg %p144
      $region42: #{basic_block_forward.1} parent=39 // pred_check_branch
        %836 = sbr.rel (%p834) target = $region44
      $region43: #{basic_block_forward.1} parent=39 // pred_region
        _
      $region44: #{basic_block_forward.1} parent=39 // pred_fallthru
        _
    $region40: #{basic_block_forward.1} parent=5 // pred_fallthru
      _
    %p837 = scmp.le.s32.totalorder 2, %s11
    // Predicated region
    $region45: #{basic_block_forward.1} parent=5 // pred_check
      %p838 = pneg %p837
    $region46: #{basic_block_forward.1} parent=5 // pred_check_branch
      %840 = sbr.rel (%p838) target = $region48
    $region47: #{basic_block_forward.1} parent=5 // pred_region
      %s841 = ssub.s32 %s11, 2
      // Predicated region
      $region49: #{basic_block_forward.1} parent=47 // pred_check
        %p842 = pneg %p150
      $region50: #{basic_block_forward.1} parent=47 // pred_check_branch
        %844 = sbr.rel (%p842) target = $region52
      $region51: #{basic_block_forward.1} parent=47 // pred_region
        %p845 = scmp.lt.s32.totalorder %s17, 1
        %s846 = scalar_select %p845, %s17, 1
        %s847 = smul.addr %s846, 2
        %s848 = smul.addr %s847, 8
        %s849 = scalar_lea.vmem %s5, %s848
      $region52: #{basic_block_forward.1} parent=47 // pred_fallthru
        _
    $region48: #{basic_block_forward.1} parent=5 // pred_fallthru
      _
  $region6: #{basic_block_forward.1} parent=0 // loop_footer
    %s15 = sadd.s32 1, %s11
  $region7: #{basic_block_forward.1} parent=0 // loop_footer_branch
    %10 = sbr.rel target = $region3
  $region8: #{basic_block_forward.1} parent=0 // loop_exit
    _

</llo_original>
